<compile_context>
chip_gen: v6e
topology: v6e:2x2x1
jax: 0.10.0
libtpu: 0.0.40
codegen_flags: <defaults>
</compile_context>

<pallas_src>
import functools

import jax
import jax.numpy as jnp
import numpy as np
from jax.experimental import pallas as pl
from jax.experimental.pallas import tpu as pltpu


def _mesh_conv_high_kernel(x_ref, gi_ref, w_ref, b_ref, out_ref, *, fuse_taps):
    # x_ref  : (C, E_src) f32  -- all (lane-padded) edge features of this batch elem
    # gi_ref : (5, T)     i32  -- 1-ring ids for this edge tile, -1 == missing
    # w_ref  : (O, 5*C) f32 if fuse_taps else (5, O, C) f32
    # b_ref  : (O, 1)     f32
    # out_ref: (O, T)     f32
    C, E_src = x_ref.shape
    T = gi_ref.shape[1]

    x = x_ref[...]
    gi = gi_ref[...]

    # Fused one-hot gather: a single (C, E_src) @ (E_src, 5*T) MXU matmul
    # yields [f0 | f1 | f2 | f3 | f4] side by side (each (C, T)).  Missing
    # neighbors (gi == -1) never match the iota -> exactly-zero columns.
    src = jax.lax.broadcasted_iota(jnp.int32, (E_src, T), 0)
    onehot = jnp.concatenate(
        [(src == gi[j:j + 1, :]).astype(x.dtype) for j in range(5)], axis=1)
    F = jnp.dot(x, onehot, preferred_element_type=jnp.float32)   # (C, 5*T)

    f0 = F[:, 0 * T:1 * T]
    f1 = F[:, 1 * T:2 * T]
    f2 = F[:, 2 * T:3 * T]
    f3 = F[:, 3 * T:4 * T]
    f4 = F[:, 4 * T:5 * T]

    # Order-invariant (symmetric) functions on all but the last 6 channels;
    # the last 6 channels keep the raw gathered neighbor values.  Sublane-iota
    # mask + where() instead of non-8-aligned sublane concats.
    row = jax.lax.broadcasted_iota(jnp.int32, (C, T), 0)
    sym = row < (C - 6)
    g1 = jnp.where(sym, f1 + f3, f1)
    g2 = jnp.where(sym, f2 + f4, f2)
    g3 = jnp.where(sym, jnp.abs(f1 - f3), f3)
    g4 = jnp.where(sym, jnp.abs(f2 - f4), f4)

    if fuse_taps:
        # C is a multiple of 8: stack the taps along the contraction axis
        # (8-aligned sublane copies) and run ONE (O, 5C) @ (5C, T) matmul.
        G = jnp.concatenate([f0, g1, g2, g3, g4], axis=0)        # (5C, T)
        acc = jnp.dot(w_ref[...], G, preferred_element_type=jnp.float32) + b_ref[...]
    else:
        # Per-tap accumulation (avoids misaligned sublane concat for odd C).
        acc = jnp.dot(w_ref[0], f0, preferred_element_type=jnp.float32) + b_ref[...]
        acc = acc + jnp.dot(w_ref[1], g1, preferred_element_type=jnp.float32)
        acc = acc + jnp.dot(w_ref[2], g2, preferred_element_type=jnp.float32)
        acc = acc + jnp.dot(w_ref[3], g3, preferred_element_type=jnp.float32)
        acc = acc + jnp.dot(w_ref[4], g4, preferred_element_type=jnp.float32)
    out_ref[...] = acc


class MeshConvHigh:
    """JAX/Pallas port of MeshConv_high. Deterministic in-script parameters."""

    def __init__(self, in_channels, out_channels, k=5, bias=True, key=None):
        assert k == 5, "MeshConv_high uses a (1, 5) kernel over self + 4 neighbors"
        assert in_channels > 6, "'high' variant keeps the last 6 channels raw"
        key = jax.random.PRNGKey(0) if key is None else key
        kw, kb = jax.random.split(key)
        bound = 1.0 / float(np.sqrt(in_channels * k))
        self.weight = jax.random.uniform(kw, (out_channels, in_channels, 1, k),
                                         jnp.float32, -bound, bound)
        if bias:
            self.bias = jax.random.uniform(kb, (out_channels,), jnp.float32, -bound, bound)
        else:
            self.bias = jnp.zeros((out_channels,), jnp.float32)
        self.k = k
        self.in_channels = in_channels
        self.out_channels = out_channels

    @staticmethod
    def pad_gemm(m, xsz):
        # gemm_edges (#edges x 4) -> prepend self id -> pad rows with 0 up to xsz
        g = np.asarray(m.gemm_edges, dtype=np.float32)
        g = np.concatenate([np.arange(m.edges_count, dtype=np.float32)[:, None], g], axis=1)
        g = np.pad(g, ((0, xsz - m.edges_count), (0, 0)), mode="constant")
        return g[None]                                                   # (1, xsz, 5)

    def __call__(self, edge_f, mesh):
        return self.forward(edge_f, mesh)

    def forward(self, x, mesh):
        x = jnp.asarray(x, jnp.float32)
        if x.ndim == 4:
            x = jnp.squeeze(x, -1)
        B, C, E = x.shape
        O = self.out_channels

        # (B, 5, E) neighbor table: row 0 = self id, missing neighbor == -1,
        # columns past edges_count are all zero (-> gather edge 0, matching the
        # PyTorch reference semantics after its +1 shift).
        Gi = np.concatenate([self.pad_gemm(m, E) for m in mesh], 0)       # (B, E, 5)
        gi = jnp.asarray(np.transpose(Gi, (0, 2, 1)).astype(np.int32))    # (B, 5, E)

        # Lane-dense edge axis: pad E up to a multiple of 128.  Padded output
        # columns gather nothing (ids == -1) and are sliced off below.
        E_pad = ((E + 127) // 128) * 128
        if E_pad != E:
            x = jnp.pad(x, ((0, 0), (0, 0), (0, E_pad - E)))
            gi = jnp.pad(gi, ((0, 0), (0, 0), (0, E_pad - E)), constant_values=-1)

        # Edge-tile size: the largest 128-multiple divisor of E_pad whose
        # fused one-hot + iota working set (6 * E_pad * T words) fits a modest
        # VMEM budget (keeps v7x's 64 MiB comfortable; v5e/v6e have headroom).
        onehot_budget = 16 * 2 ** 20
        TILE_E = 128
        cand = E_pad
        while cand >= 128:
            if E_pad % cand == 0 and cand % 128 == 0 and 6 * E_pad * cand * 4 <= onehot_budget:
                TILE_E = cand
                break
            cand -= 128
        n_t = E_pad // TILE_E

        fuse_taps = (C % 8 == 0)
        if fuse_taps:
            # (O, 5C) with column j*C + c == weight[o, c, 0, j]
            w_arg = jnp.transpose(self.weight[:, :, 0, :], (0, 2, 1)).reshape(O, 5 * C)
            w_spec = pl.BlockSpec((O, 5 * C), lambda b, t: (0, 0))
        else:
            w_arg = jnp.transpose(self.weight[:, :, 0, :], (2, 0, 1))     # (5, O, C)
            w_spec = pl.BlockSpec((5, O, C), lambda b, t: (0, 0, 0))
        bias2 = self.bias.reshape(O, 1)

        # Working-set estimate -> scoped-VMEM limit with headroom.
        ws = (6 * E_pad * TILE_E * 4            # fused one-hot (f32) + iota (i32)
              + 2 * C * E_pad * 4               # x (double-buffered)
              + 8 * C * 5 * TILE_E * 4          # F, g1..g4, stacked G
              + 2 * (5 + O) * TILE_E * 4        # gi + out tiles
              + 5 * O * max(C, 128) * 4 + 512)  # weights + bias (lane padded)
        vmem_limit = int(min(64 * 2 ** 20, max(24 * 2 ** 20, 1.3 * ws)))

        cost = pl.CostEstimate(
            flops=int(2 * B * C * E_pad * 5 * E_pad + 2 * B * 5 * O * C * E_pad),
            transcendentals=0,
            bytes_accessed=int(4 * (B * C * E_pad + B * 5 * E_pad
                                    + 5 * O * C + O + B * O * E_pad)),
        )

        kernel = functools.partial(_mesh_conv_high_kernel, fuse_taps=fuse_taps)

        out = pl.pallas_call(
            kernel,
            out_shape=jax.ShapeDtypeStruct((B, O, E_pad), jnp.float32),
            grid=(B, n_t),
            in_specs=[
                pl.BlockSpec((None, C, E_pad), lambda b, t: (b, 0, 0)),   # x: resident per b
                pl.BlockSpec((None, 5, TILE_E), lambda b, t: (b, 0, t)),  # gi tile
                w_spec,                                                   # weights (fetch once)
                pl.BlockSpec((O, 1), lambda b, t: (0, 0)),                # bias (fetch once)
            ],
            out_specs=pl.BlockSpec((None, O, TILE_E), lambda b, t: (b, 0, t)),
            compiler_params=pltpu.CompilerParams(
                dimension_semantics=("parallel", "parallel"),
                vmem_limit_bytes=vmem_limit,
            ),
            cost_estimate=cost,
        )(x, gi, w_arg, bias2)

        out = out[:, :, :E]
        return out[:, :, :, None]   # (B, O, E, 1) — same as PyTorch Conv2d output


class Mesh:
    """Minimal synthetic mesh data-structure (gemm_edges + edges_count)."""

    def __init__(self, gemm_edges, edges_count):
        self.gemm_edges = gemm_edges      # (edges_count, 4) int, -1 == no neighbor
        self.edges_count = edges_count


def reference_forward(x, meshes, weight, bias):
    """Pure-JAX reference reproducing the PyTorch semantics, for verification."""
    x = jnp.asarray(x, jnp.float32)
    B, C, E = x.shape
    Gi = jnp.asarray(np.concatenate([MeshConvHigh.pad_gemm(m, E) for m in meshes], 0))
    gi = (Gi + 1.0).astype(jnp.int32)                                    # (B, E, 5)
    x_pad = jnp.concatenate([jnp.zeros((B, C, 1), jnp.float32), x], axis=2)
    f = jax.vmap(lambda xp, g: xp[:, g])(x_pad, gi)                      # (B, C, E, 5)
    f_symm = f[:, :-6]
    x1 = f_symm[..., 1] + f_symm[..., 3]
    x2 = f_symm[..., 2] + f_symm[..., 4]
    x3 = jnp.abs(f_symm[..., 1] - f_symm[..., 3])
    x4 = jnp.abs(f_symm[..., 2] - f_symm[..., 4])
    f_symm = jnp.stack([f_symm[..., 0], x1, x2, x3, x4], axis=3)
    G = jnp.concatenate([f_symm, f[:, -6:]], axis=1)                     # (B, C, E, 5)
    out = jnp.einsum("ocj,bcej->boe", weight[:, :, 0, :], G) + bias[None, :, None]
    return out[:, :, :, None]


if __name__ == "__main__":
    B, C_in, C_out, E, k = 2, 16, 8, 128, 5

    key = jax.random.PRNGKey(0)
    kx, kg0, kg1, kmod = jax.random.split(key, 4)

    x = jax.random.normal(kx, (B, C_in, E), jnp.float32)

    # Synthetic meshes: neighbor indices in [-1, edges_count); second mesh has padding.
    edge_counts = [E, E - 16]
    meshes = []
    for ec, gk in zip(edge_counts, [kg0, kg1]):
        ge = np.asarray(jax.random.randint(gk, (ec, 4), -1, ec), dtype=np.int64)
        meshes.append(Mesh(ge, ec))

    layer = MeshConvHigh(C_in, C_out, k=k, bias=True, key=kmod)
    out = layer(x, meshes)
    out = jax.block_until_ready(out)

    ref = reference_forward(x, meshes, layer.weight, layer.bias)
    np.testing.assert_allclose(np.asarray(out), np.asarray(ref), rtol=1e-4, atol=1e-4)
    assert out.shape == (B, C_out, E, 1)

    print("KERNEL_OK")
</pallas_src>

<mosaic_0001>
module attributes {stable_mosaic.version = 11 : i64} {
  func.func @_mesh_conv_high_kernel(%arg0: i32, %arg1: i32, %arg2: memref<1x16x128xf32, #tpu.memory_space<vmem>>, %arg3: memref<1x5x128xi32, #tpu.memory_space<vmem>>, %arg4: memref<8x80xf32, #tpu.memory_space<vmem>>, %arg5: memref<8x1xf32, #tpu.memory_space<vmem>>, %arg6: memref<1x8x128xf32, #tpu.memory_space<vmem>>) attributes {dimension_semantics = [#tpu.dimension_semantics<parallel>, #tpu.dimension_semantics<parallel>], iteration_bounds = array<i64: 2, 1>, scalar_prefetch = 0 : i64, scratch_operands = 0 : i64, tpu.core_type = #tpu.core_type<tc>, window_params = [{transform_indices = @transform_0, window_bounds = array<i64: 1, 16, 128>}, {transform_indices = @transform_1, window_bounds = array<i64: 1, 5, 128>}, {pipeline_mode = #tpu.pipeline_mode<synchronous>, transform_indices = @transform_2, window_bounds = array<i64: 8, 80>}, {pipeline_mode = #tpu.pipeline_mode<synchronous>, transform_indices = @transform_3, window_bounds = array<i64: 8, 1>}, {transform_indices = @transform_4, window_bounds = array<i64: 1, 8, 128>}]} {
    %c0 = arith.constant 0 : index
    %c0_0 = arith.constant 0 : index
    %c0_1 = arith.constant 0 : index
    %0 = vector.load %arg2[%c0, %c0_0, %c0_1] : memref<1x16x128xf32, #tpu.memory_space<vmem>>, vector<1x16x128xf32>
    %1 = vector.shape_cast %0 : vector<1x16x128xf32> to vector<16x128xf32>
    %c0_2 = arith.constant 0 : index
    %c0_3 = arith.constant 0 : index
    %c0_4 = arith.constant 0 : index
    %2 = vector.load %arg3[%c0_2, %c0_3, %c0_4] : memref<1x5x128xi32, #tpu.memory_space<vmem>>, vector<1x5x128xi32>
    %3 = vector.shape_cast %2 : vector<1x5x128xi32> to vector<5x128xi32>
    %4 = tpu.iota {dimensions = array<i32: 0>} : vector<128x128xi32>
    %5 = vector.extract_strided_slice %3 {offsets = [0, 0], sizes = [1, 128], strides = [1, 1]} : vector<5x128xi32> to vector<1x128xi32>
    %6 = vector.broadcast %5 : vector<1x128xi32> to vector<128x128xi32>
    %7 = arith.cmpi eq, %4, %6 : vector<128x128xi32>
    %8 = arith.extui %7 : vector<128x128xi1> to vector<128x128xi32>
    %9 = arith.sitofp %8 : vector<128x128xi32> to vector<128x128xf32>
    %10 = vector.extract_strided_slice %3 {offsets = [1, 0], sizes = [1, 128], strides = [1, 1]} : vector<5x128xi32> to vector<1x128xi32>
    %11 = vector.broadcast %10 : vector<1x128xi32> to vector<128x128xi32>
    %12 = arith.cmpi eq, %4, %11 : vector<128x128xi32>
    %13 = arith.extui %12 : vector<128x128xi1> to vector<128x128xi32>
    %14 = arith.sitofp %13 : vector<128x128xi32> to vector<128x128xf32>
    %15 = vector.extract_strided_slice %3 {offsets = [2, 0], sizes = [1, 128], strides = [1, 1]} : vector<5x128xi32> to vector<1x128xi32>
    %16 = vector.broadcast %15 : vector<1x128xi32> to vector<128x128xi32>
    %17 = arith.cmpi eq, %4, %16 : vector<128x128xi32>
    %18 = arith.extui %17 : vector<128x128xi1> to vector<128x128xi32>
    %19 = arith.sitofp %18 : vector<128x128xi32> to vector<128x128xf32>
    %20 = vector.extract_strided_slice %3 {offsets = [3, 0], sizes = [1, 128], strides = [1, 1]} : vector<5x128xi32> to vector<1x128xi32>
    %21 = vector.broadcast %20 : vector<1x128xi32> to vector<128x128xi32>
    %22 = arith.cmpi eq, %4, %21 : vector<128x128xi32>
    %23 = arith.extui %22 : vector<128x128xi1> to vector<128x128xi32>
    %24 = arith.sitofp %23 : vector<128x128xi32> to vector<128x128xf32>
    %25 = vector.extract_strided_slice %3 {offsets = [4, 0], sizes = [1, 128], strides = [1, 1]} : vector<5x128xi32> to vector<1x128xi32>
    %26 = vector.broadcast %25 : vector<1x128xi32> to vector<128x128xi32>
    %27 = arith.cmpi eq, %4, %26 : vector<128x128xi32>
    %28 = arith.extui %27 : vector<128x128xi1> to vector<128x128xi32>
    %29 = arith.sitofp %28 : vector<128x128xi32> to vector<128x128xf32>
    %30 = tpu.concatenate %9, %14, %19, %24, %29 in 1 : vector<128x128xf32>, vector<128x128xf32>, vector<128x128xf32>, vector<128x128xf32>, vector<128x128xf32> -> vector<128x640xf32>
    %cst = arith.constant dense<0.000000e+00> : vector<16x640xf32>
    %31 = tpu.matmul %1, %30, %cst {dimension_numbers = #tpu.dot_dimension_numbers<[1], [0], [0], [1], [0, 0, 1, 1], [], []>} : vector<16x128xf32>, vector<128x640xf32>, vector<16x640xf32> -> vector<16x640xf32>
    %32 = vector.extract_strided_slice %31 {offsets = [0, 0], sizes = [16, 128], strides = [1, 1]} : vector<16x640xf32> to vector<16x128xf32>
    %33 = vector.extract_strided_slice %31 {offsets = [0, 128], sizes = [16, 128], strides = [1, 1]} : vector<16x640xf32> to vector<16x128xf32>
    %34 = vector.extract_strided_slice %31 {offsets = [0, 256], sizes = [16, 128], strides = [1, 1]} : vector<16x640xf32> to vector<16x128xf32>
    %35 = vector.extract_strided_slice %31 {offsets = [0, 384], sizes = [16, 128], strides = [1, 1]} : vector<16x640xf32> to vector<16x128xf32>
    %36 = vector.extract_strided_slice %31 {offsets = [0, 512], sizes = [16, 128], strides = [1, 1]} : vector<16x640xf32> to vector<16x128xf32>
    %37 = tpu.iota {dimensions = array<i32: 0>} : vector<16x128xi32>
    %c10_i32 = arith.constant 10 : i32
    %38 = vector.broadcast %c10_i32 : i32 to vector<16x128xi32>
    %39 = arith.cmpi slt, %37, %38 : vector<16x128xi32>
    %40 = arith.addf %33, %35 : vector<16x128xf32>
    %41 = arith.select %39, %40, %33 : vector<16x128xi1>, vector<16x128xf32>
    %42 = arith.addf %34, %36 : vector<16x128xf32>
    %43 = arith.select %39, %42, %34 : vector<16x128xi1>, vector<16x128xf32>
    %44 = arith.subf %33, %35 : vector<16x128xf32>
    %45 = math.absf %44 : vector<16x128xf32>
    %46 = arith.select %39, %45, %35 : vector<16x128xi1>, vector<16x128xf32>
    %47 = arith.subf %34, %36 : vector<16x128xf32>
    %48 = math.absf %47 : vector<16x128xf32>
    %49 = arith.select %39, %48, %36 : vector<16x128xi1>, vector<16x128xf32>
    %50 = tpu.concatenate %32, %41, %43, %46, %49 in 0 : vector<16x128xf32>, vector<16x128xf32>, vector<16x128xf32>, vector<16x128xf32>, vector<16x128xf32> -> vector<80x128xf32>
    %c0_5 = arith.constant 0 : index
    %c0_6 = arith.constant 0 : index
    %51 = vector.load %arg4[%c0_5, %c0_6] : memref<8x80xf32, #tpu.memory_space<vmem>>, vector<8x80xf32>
    %cst_7 = arith.constant dense<0.000000e+00> : vector<8x128xf32>
    %52 = tpu.matmul %51, %50, %cst_7 {dimension_numbers = #tpu.dot_dimension_numbers<[1], [0], [0], [1], [0, 0, 1, 1], [], []>} : vector<8x80xf32>, vector<80x128xf32>, vector<8x128xf32> -> vector<8x128xf32>
    %c0_8 = arith.constant 0 : index
    %c0_9 = arith.constant 0 : index
    %53 = vector.load %arg5[%c0_8, %c0_9] : memref<8x1xf32, #tpu.memory_space<vmem>>, vector<8x1xf32>
    %54 = vector.broadcast %53 : vector<8x1xf32> to vector<8x128xf32>
    %55 = arith.addf %52, %54 : vector<8x128xf32>
    %c0_10 = arith.constant 0 : index
    %c0_11 = arith.constant 0 : index
    %c0_12 = arith.constant 0 : index
    %56 = vector.load %arg6[%c0_10, %c0_11, %c0_12] : memref<1x8x128xf32, #tpu.memory_space<vmem>>, vector<1x8x128xf32>
    %57 = vector.shape_cast %56 : vector<1x8x128xf32> to vector<8x128xf32>
    %58 = vector.shape_cast %55 : vector<8x128xf32> to vector<1x8x128xf32>
    tpu.vector_store %arg6[%c0_10, %c0_11, %c0_12], %58 {strides = array<i32>} : memref<1x8x128xf32, #tpu.memory_space<vmem>>, vector<1x8x128xf32>,
    return
  }
  func.func @transform_0(%arg0: i32, %arg1: i32) -> (i32, i32, i32) {
    %c0_i32 = arith.constant 0 : i32
    %c0_i32_0 = arith.constant 0 : i32
    %c0_i32_1 = arith.constant 0 : i32
    return %arg0, %c0_i32, %c0_i32_0 : i32, i32, i32
  }
  func.func @transform_1(%arg0: i32, %arg1: i32) -> (i32, i32, i32) {
    %c0_i32 = arith.constant 0 : i32
    %c0_i32_0 = arith.constant 0 : i32
    return %arg0, %c0_i32, %arg1 : i32, i32, i32
  }
  func.func @transform_2(%arg0: i32, %arg1: i32) -> (i32, i32) {
    %c0_i32 = arith.constant 0 : i32
    %c0_i32_0 = arith.constant 0 : i32
    %c0_i32_1 = arith.constant 0 : i32
    return %c0_i32, %c0_i32_0 : i32, i32
  }
  func.func @transform_3(%arg0: i32, %arg1: i32) -> (i32, i32) {
    %c0_i32 = arith.constant 0 : i32
    %c0_i32_0 = arith.constant 0 : i32
    %c0_i32_1 = arith.constant 0 : i32
    return %c0_i32, %c0_i32_0 : i32, i32
  }
  func.func @transform_4(%arg0: i32, %arg1: i32) -> (i32, i32, i32) {
    %c0_i32 = arith.constant 0 : i32
    %c0_i32_0 = arith.constant 0 : i32
    return %arg0, %c0_i32, %arg1 : i32, i32, i32
  }
}

</mosaic_0001>

<llo_original>
// kernel: tpu_custom_call.1
$region0: #{tpu_custom_call.1}
  #allocation0 [shape = 'u32[]', space=smem, size = 0x4, offset = 0x4, fixed_abs, tag = 'smem constant byte address 0x4 - core index']
  #allocation1 [shape = 'u32[144,128]{1,0:T(1,128)}', space=vmem, size = 0x12000, scoped, tag = 'internal scratch']
  %s0 = inlined_call_operand.vmem [shape: f32[2,16,128], index: 0, kind: input, shape index: {}]
  %s1 = inlined_call_operand.vmem [shape: s32[2,5,128], index: 1, kind: input, shape index: {}]
  %s2 = inlined_call_operand.hbm [shape: f32[8,80], index: 2, kind: input, shape index: {}]
  %s3 = inlined_call_operand.vmem [shape: f32[8,1], index: 3, kind: input, shape index: {}]
  %s4 = inlined_call_operand.hbm [shape: f32[2,8,128], index: 4, kind: output, shape index: {}]
  %s5 = sld [smem:[#allocation0]]
  $region53: #{tpu_custom_call.1} parent=0
    _
  %s7 = ssub.s32 1, %s5
  %s8 = scalar_select 0, %s7, %s5
  $region1: #{tpu_custom_call.1} parent=0
    #allocation2 [shape = 'u8[4096]{0}', space=vmem, size = 0x1000, scoped, tag = 'input window, operand 2, single buffered']
    #allocation3 [shape = 's32[2]{0}', space=sflag, size = 0x8, scoped, tag = 'scoped memory for tpu_custom_call.1']
    #allocation4 [shape = 's32[2]{0}', space=sflag, size = 0x8, scoped, tag = 'scoped memory for tpu_custom_call.1']
    #allocation5 [shape = 'u8[8192]{0}', space=vmem, size = 0x2000, scoped, tag = 'output window, operand 0']
    %9 = vsyncpa [#allocation3], 0
    %10 = vsyncpa [#allocation4], 0
    %s11 = scalar_lea.sflag [#allocation4], 1
    %12 = vsyncpa %s11, 0
    loop: start=0, step=1, limit=4
    $region2: #{tpu_custom_call.1} parent=1 // loop_pre_header
      _
    $region3: #{tpu_custom_call.1} parent=1 // loop_header
      %s14 = sphi 0, %s18
      %p15 = scmp.ge.s32.totalorder %s14, 4
      %s21 = sphi 0, %s33
      %s22 = sphi 0, %s29
      %s23 = sphi 0, %s21
      %s24 = sphi 0, %s22
      %s25 = sphi 0, %s23
      %s26 = sphi 0, %s24
      %s36 = sphi 0, %s38
      %s39 = sphi 0, %s36
      %s40 = sphi 0, %s39
      %s56 = sphi 0, %s40
      %s64 = sphi 0, %s66
      %s67 = sphi 0, %s64
      %s68 = sphi 0, %s67
      %s84 = sphi 0, %s68
      %s88 = sphi 0, %s88
      %s90 = sphi 0, %s88
      %s91 = sphi 0, %s90
      %s105 = sphi 0, %s91
      %s109 = sphi 0, %s109
      %s111 = sphi 0, %s109
      %s112 = sphi 0, %s111
      %s126 = sphi 0, %s112
      %s134 = sphi 0, %s136
      %s137 = sphi 0, %s134
      %s138 = sphi 0, %s137
      %s154 = sphi 0, %s138
    $region4: #{tpu_custom_call.1} parent=1 // loop_header_branch
      %17 = sbr.rel (%p15) target = $region8
    $region5: #{tpu_custom_call.1} parent=1 // loop_body
      %s19 = ssub.s32 %s14, 1
      %s20 = ssub.s32 %s14, 2
      %s27 = sadd.s32 1, %s22
      %p28 = scmp.ge.s32.totalorder %s27, 1
      %s29 = scalar_select %p28, 0, %s27
      %s30 = sadd.s32 1, %s21
      %s31 = scalar_select %p28, %s30, %s21
      %p32 = scmp.ge.s32.totalorder %s31, 2
      %s33 = scalar_select %p32, 0, %s31
      %s34 = ssub.s32 %s21, %s33
      %p35 = scmp.eq.s32.totalorder %s34, 0
      %s37 = sadd.s32 %s36, 1
      %s38 = scalar_select %p35, %s36, %s37
      %p41 = pneg %p35
      %p42 = scmp.eq.s32.totalorder %s14, 1
      %p43 = por %p41, %p42
      %p44 = scmp.ne.s32.totalorder %s36, %s39
      %p45 = scmp.eq.s32.totalorder %s14, 0
      %p46 = por %p44, %p45
      %p47 = scmp.ne.s32.totalorder %s36, %s39
      %p48 = scmp.eq.s32.totalorder %s19, 1
      %p49 = por %p47, %p48
      %p50 = scmp.ne.s32.totalorder %s39, %s40
      %p51 = scmp.eq.s32.totalorder %s19, 0
      %p52 = por %p50, %p51
      %p53 = scmp.ne.s32.totalorder %s39, %s40
      %p54 = scmp.eq.s32.totalorder %s20, 1
      %p55 = por %p53, %p54
      %p57 = scmp.ne.s32.totalorder %s40, %s56
      %p58 = scmp.eq.s32.totalorder %s20, 0
      %p59 = por %p57, %p58
      %s60 = ssub.s32 %s21, %s33
      %s61 = ssub.s32 %s22, %s29
      %s62 = sor.u32 %s60, %s61
      %p63 = scmp.eq.s32.totalorder %s62, 0
      %s65 = sadd.s32 %s64, 1
      %s66 = scalar_select %p63, %s64, %s65
      %p69 = pneg %p63
      %p70 = scmp.eq.s32.totalorder %s14, 1
      %p71 = por %p69, %p70
      %p72 = scmp.ne.s32.totalorder %s64, %s67
      %p73 = scmp.eq.s32.totalorder %s14, 0
      %p74 = por %p72, %p73
      %p75 = scmp.ne.s32.totalorder %s64, %s67
      %p76 = scmp.eq.s32.totalorder %s19, 1
      %p77 = por %p75, %p76
      %p78 = scmp.ne.s32.totalorder %s67, %s68
      %p79 = scmp.eq.s32.totalorder %s19, 0
      %p80 = por %p78, %p79
      %p81 = scmp.ne.s32.totalorder %s67, %s68
      %p82 = scmp.eq.s32.totalorder %s20, 1
      %p83 = por %p81, %p82
      %p85 = scmp.ne.s32.totalorder %s68, %s84
      %p86 = scmp.eq.s32.totalorder %s20, 0
      %p87 = por %p85, %p86
      %s89 = sadd.s32 %s88, 1
      %p92 = scmp.eq.s32.totalorder %s14, 1
      %p93 = scmp.ne.s32.totalorder %s88, %s90
      %p94 = scmp.eq.s32.totalorder %s14, 0
      %p95 = por %p93, %p94
      %p96 = scmp.ne.s32.totalorder %s88, %s90
      %p97 = scmp.eq.s32.totalorder %s19, 1
      %p98 = por %p96, %p97
      %p99 = scmp.ne.s32.totalorder %s90, %s91
      %p100 = scmp.eq.s32.totalorder %s19, 0
      %p101 = por %p99, %p100
      %p102 = scmp.ne.s32.totalorder %s90, %s91
      %p103 = scmp.eq.s32.totalorder %s20, 1
      %p104 = por %p102, %p103
      %p106 = scmp.ne.s32.totalorder %s91, %s105
      %p107 = scmp.eq.s32.totalorder %s20, 0
      %p108 = por %p106, %p107
      %s110 = sadd.s32 %s109, 1
      %p113 = scmp.eq.s32.totalorder %s14, 1
      %p114 = scmp.ne.s32.totalorder %s109, %s111
      %p115 = scmp.eq.s32.totalorder %s14, 0
      %p116 = por %p114, %p115
      %p117 = scmp.ne.s32.totalorder %s109, %s111
      %p118 = scmp.eq.s32.totalorder %s19, 1
      %p119 = por %p117, %p118
      %p120 = scmp.ne.s32.totalorder %s111, %s112
      %p121 = scmp.eq.s32.totalorder %s19, 0
      %p122 = por %p120, %p121
      %p123 = scmp.ne.s32.totalorder %s111, %s112
      %p124 = scmp.eq.s32.totalorder %s20, 1
      %p125 = por %p123, %p124
      %p127 = scmp.ne.s32.totalorder %s112, %s126
      %p128 = scmp.eq.s32.totalorder %s20, 0
      %p129 = por %p127, %p128
      %s130 = ssub.s32 %s21, %s33
      %s131 = ssub.s32 %s22, %s29
      %s132 = sor.u32 %s130, %s131
      %p133 = scmp.eq.s32.totalorder %s132, 0
      %s135 = sadd.s32 %s134, 1
      %s136 = scalar_select %p133, %s134, %s135
      %p139 = pneg %p133
      %p140 = scmp.eq.s32.totalorder %s14, 1
      %p141 = por %p139, %p140
      %p142 = scmp.ne.s32.totalorder %s134, %s137
      %p143 = scmp.eq.s32.totalorder %s14, 0
      %p144 = por %p142, %p143
      %p145 = scmp.ne.s32.totalorder %s134, %s137
      %p146 = scmp.eq.s32.totalorder %s19, 1
      %p147 = por %p145, %p146
      %p148 = scmp.ne.s32.totalorder %s137, %s138
      %p149 = scmp.eq.s32.totalorder %s19, 0
      %p150 = por %p148, %p149
      %p151 = scmp.ne.s32.totalorder %s137, %s138
      %p152 = scmp.eq.s32.totalorder %s20, 1
      %p153 = por %p151, %p152
      %p155 = scmp.ne.s32.totalorder %s138, %s154
      %p156 = scmp.eq.s32.totalorder %s20, 0
      %p157 = por %p155, %p156
      %p158 = scmp.le.s32.totalorder 1, %s14
      %p159 = scmp.lt.s32.totalorder %s14, 3
      %p160 = pnand %p158, %p159
      %p161 = pneg %p160
      // Predicated region
      $region9: #{tpu_custom_call.1} parent=5 // pred_check
        _
      $region10: #{tpu_custom_call.1} parent=5 // pred_check_branch
        %163 = sbr.rel (%p160) target = $region12
      $region11: #{tpu_custom_call.1} parent=5 // pred_region
        %s164 = ssub.s32 %s14, 1
        // Predicated region
        $region13: #{tpu_custom_call.1} parent=11 // pred_check
          %p165 = pneg %p101
        $region14: #{tpu_custom_call.1} parent=11 // pred_check_branch
          %167 = sbr.rel (%p165) target = $region16
        $region15: #{tpu_custom_call.1} parent=11 // pred_region
          %s169 = ssub.s32 128, 128
          %170 = vsyncadd [#allocation3], %s169
          %s172 = sshll.u32 [#allocation2], 4
          %s173 = int_to_ptr.vmem [resolvable:$true] %s172
          %175 = dma.hbm_to_vmem [thread:$0]  %s2, 128, %s173, [#allocation3]
        $region16: #{tpu_custom_call.1} parent=11 // pred_fallthru
          _
        // Predicated region
        $region17: #{tpu_custom_call.1} parent=11 // pred_check
          %p176 = pneg %p122
        $region18: #{tpu_custom_call.1} parent=11 // pred_check_branch
          %178 = sbr.rel (%p176) target = $region20
        $region19: #{tpu_custom_call.1} parent=11 // pred_region
          _
        $region20: #{tpu_custom_call.1} parent=11 // pred_fallthru
          _
      $region12: #{tpu_custom_call.1} parent=5 // pred_fallthru
        _
      %p179 = scmp.lt.s32.totalorder %s14, 2
      // Predicated region
      $region21: #{tpu_custom_call.1} parent=5 // pred_check
        %p180 = pneg %p179
      $region22: #{tpu_custom_call.1} parent=5 // pred_check_branch
        %182 = sbr.rel (%p180) target = $region24
      $region23: #{tpu_custom_call.1} parent=5 // pred_region
        // Predicated region
        $region25: #{tpu_custom_call.1} parent=23 // pred_check
          %p183 = pneg %p46
        $region26: #{tpu_custom_call.1} parent=23 // pred_check_branch
          %185 = sbr.rel (%p183) target = $region28
        $region27: #{tpu_custom_call.1} parent=23 // pred_region
          %p186 = scmp.lt.s32.totalorder %s21, 1
          %s187 = scalar_select %p186, %s21, 1
          %s188 = smul.addr %s187, 2
          %s189 = smul.addr %s188, 8
          %s190 = scalar_lea.vmem %s0, %s189
        $region28: #{tpu_custom_call.1} parent=23 // pred_fallthru
          _
        // Predicated region
        $region29: #{tpu_custom_call.1} parent=23 // pred_check
          %p191 = pneg %p74
        $region30: #{tpu_custom_call.1} parent=23 // pred_check_branch
          %193 = sbr.rel (%p191) target = $region32
        $region31: #{tpu_custom_call.1} parent=23 // pred_region
          %p194 = scmp.lt.s32.totalorder %s21, 1
          %s195 = scalar_select %p194, %s21, 1
          %p196 = scmp.lt.s32.totalorder %s22, 0
          %s197 = scalar_select %p196, %s22, 0
          %s198 = sadd.s32 %s197, %s195
          %s199 = smul.addr %s198, 8
          %s200 = scalar_lea.vmem %s1, %s199
        $region32: #{tpu_custom_call.1} parent=23 // pred_fallthru
          _
      $region24: #{tpu_custom_call.1} parent=5 // pred_fallthru
        _
      %p201 = scmp.le.s32.totalorder 1, %s14
      %p202 = scmp.lt.s32.totalorder %s14, 3
      %p203 = pnand %p201, %p202
      %p204 = pneg %p203
      // Predicated region
      $region33: #{tpu_custom_call.1} parent=5 // pred_check
        _
      $region34: #{tpu_custom_call.1} parent=5 // pred_check_branch
        %206 = sbr.rel (%p203) target = $region36
      $region35: #{tpu_custom_call.1} parent=5 // pred_region
        %s207 = ssub.s32 %s14, 1
        // Predicated region
        $region37: #{tpu_custom_call.1} parent=35 // pred_check
          %p208 = pneg %p101
        $region38: #{tpu_custom_call.1} parent=35 // pred_check_branch
          %210 = sbr.rel (%p208) target = $region40
        $region39: #{tpu_custom_call.1} parent=35 // pred_region
          %211 = dma.done [#allocation3], 128
        $region40: #{tpu_custom_call.1} parent=35 // pred_fallthru
          _
        %p212 = scmp.lt.s32.totalorder %s23, 1
        %s213 = scalar_select %p212, %s23, 1
        %s214 = smul.addr %s213, 2
        %s215 = smul.addr %s214, 8
        %s216 = scalar_lea.vmem %s0, %s215
        %p217 = pneg %p52
        %p218 = pneg %p49
        %p219 = scmp.lt.s32.totalorder %s23, 1
        %s220 = scalar_select %p219, %s23, 1
        %p221 = scmp.lt.s32.totalorder %s24, 0
        %s222 = scalar_select %p221, %s24, 0
        %s223 = sadd.s32 %s222, %s220
        %s224 = smul.addr %s223, 8
        %s225 = scalar_lea.vmem %s1, %s224
        %p226 = pneg %p80
        %p227 = pneg %p77
        %p228 = pneg %p101
        %p229 = pneg %p98
        %p230 = pneg %p122
        %p231 = pneg %p119
        %p232 = pneg %p150
        %p233 = pneg %p147
        %s234 = sand.u32 %s137, 1
        %s235 = scalar_lea.sflag [#allocation4], %s234
        %s236 = sand.u32 %s137, 1
        %s237 = smul.addr %s236, 8
        %s238 = scalar_lea.vmem [#allocation5], %s237
        %p239 = scmp.lt.s32.totalorder %s23, 1
        %s240 = scalar_select %p239, %s23, 1
        %s241 = smul.addr %s240, 2
        %s242 = smul.addr %s241, 8
        %s243 = scalar_lea.vmem %s0, %s242
        %p244 = scmp.lt.s32.totalorder %s23, 1
        %s245 = scalar_select %p244, %s23, 1
        %p246 = scmp.lt.s32.totalorder %s24, 0
        %s247 = scalar_select %p246, %s24, 0
        %s248 = sadd.s32 %s247, %s245
        %s249 = smul.addr %s248, 8
        %s250 = scalar_lea.vmem %s1, %s249
        %v251 = vld [vmem:[%s243] sm:$0xff]
        %v252 = vld [vmem:[%s243 + $0x8] sm:$0xff]
        %v253 = vld [vmem:[%s250] sm:$0x1f]
        %v254 = vlaneseq
        %v255 = vshrl.u32 %v254, 7
        %v256 = vadd.s32 %v255, 8
        %v257 = vadd.s32 %v255, 16
        %v258 = vadd.s32 %v255, 24
        %v259 = vadd.s32 %v255, 32
        %v260 = vadd.s32 %v255, 40
        %v261 = vadd.s32 %v255, 48
        %v262 = vadd.s32 %v255, 56
        %v263 = vadd.s32 %v255, 64
        %v264 = vadd.s32 %v255, 72
        %v265 = vadd.s32 %v255, 80
        %v266 = vadd.s32 %v255, 88
        %v267 = vadd.s32 %v255, 96
        %v268 = vadd.s32 %v255, 104
        %v269 = vadd.s32 %v255, 112
        %v270 = vadd.s32 %v255, 120
        %v271 = vlaneseq
        %v272 = vshrl.u32 %v271, 7
        %v273 = vsub.s32 0, %v272
        %v274 = vrot.slane %v253, %v273
        %vm275 = vcmp.eq.s32.totalorder %v255, %v274
        %vm276 = vcmp.eq.s32.totalorder %v256, %v274
        %vm277 = vcmp.eq.s32.totalorder %v257, %v274
        %vm278 = vcmp.eq.s32.totalorder %v258, %v274
        %vm279 = vcmp.eq.s32.totalorder %v259, %v274
        %vm280 = vcmp.eq.s32.totalorder %v260, %v274
        %vm281 = vcmp.eq.s32.totalorder %v261, %v274
        %vm282 = vcmp.eq.s32.totalorder %v262, %v274
        %vm283 = vcmp.eq.s32.totalorder %v263, %v274
        %vm284 = vcmp.eq.s32.totalorder %v264, %v274
        %vm285 = vcmp.eq.s32.totalorder %v265, %v274
        %vm286 = vcmp.eq.s32.totalorder %v266, %v274
        %vm287 = vcmp.eq.s32.totalorder %v267, %v274
        %vm288 = vcmp.eq.s32.totalorder %v268, %v274
        %vm289 = vcmp.eq.s32.totalorder %v269, %v274
        %vm290 = vcmp.eq.s32.totalorder %v270, %v274
        %v291 = vsel %vm275, 1, 0
        %v292 = vsel %vm276, 1, 0
        %v293 = vsel %vm277, 1, 0
        %v294 = vsel %vm278, 1, 0
        %v295 = vsel %vm279, 1, 0
        %v296 = vsel %vm280, 1, 0
        %v297 = vsel %vm281, 1, 0
        %v298 = vsel %vm282, 1, 0
        %v299 = vsel %vm283, 1, 0
        %v300 = vsel %vm284, 1, 0
        %v301 = vsel %vm285, 1, 0
        %v302 = vsel %vm286, 1, 0
        %v303 = vsel %vm287, 1, 0
        %v304 = vsel %vm288, 1, 0
        %v305 = vsel %vm289, 1, 0
        %v306 = vsel %vm290, 1, 0
        %v307 = vcvt.s32.f32 %v291
        %v308 = vcvt.s32.f32 %v292
        %v309 = vcvt.s32.f32 %v293
        %v310 = vcvt.s32.f32 %v294
        %v311 = vcvt.s32.f32 %v295
        %v312 = vcvt.s32.f32 %v296
        %v313 = vcvt.s32.f32 %v297
        %v314 = vcvt.s32.f32 %v298
        %v315 = vcvt.s32.f32 %v299
        %v316 = vcvt.s32.f32 %v300
        %v317 = vcvt.s32.f32 %v301
        %v318 = vcvt.s32.f32 %v302
        %v319 = vcvt.s32.f32 %v303
        %v320 = vcvt.s32.f32 %v304
        %v321 = vcvt.s32.f32 %v305
        %v322 = vcvt.s32.f32 %v306
        %v323 = vlaneseq
        %v324 = vshrl.u32 %v323, 7
        %v325 = vsub.s32 1, %v324
        %v326 = vrot.slane %v253, %v325
        %vm327 = vcmp.eq.s32.totalorder %v255, %v326
        %vm328 = vcmp.eq.s32.totalorder %v256, %v326
        %vm329 = vcmp.eq.s32.totalorder %v257, %v326
        %vm330 = vcmp.eq.s32.totalorder %v258, %v326
        %vm331 = vcmp.eq.s32.totalorder %v259, %v326
        %vm332 = vcmp.eq.s32.totalorder %v260, %v326
        %vm333 = vcmp.eq.s32.totalorder %v261, %v326
        %vm334 = vcmp.eq.s32.totalorder %v262, %v326
        %vm335 = vcmp.eq.s32.totalorder %v263, %v326
        %vm336 = vcmp.eq.s32.totalorder %v264, %v326
        %vm337 = vcmp.eq.s32.totalorder %v265, %v326
        %vm338 = vcmp.eq.s32.totalorder %v266, %v326
        %vm339 = vcmp.eq.s32.totalorder %v267, %v326
        %vm340 = vcmp.eq.s32.totalorder %v268, %v326
        %vm341 = vcmp.eq.s32.totalorder %v269, %v326
        %vm342 = vcmp.eq.s32.totalorder %v270, %v326
        %v343 = vsel %vm327, 1, 0
        %v344 = vsel %vm328, 1, 0
        %v345 = vsel %vm329, 1, 0
        %v346 = vsel %vm330, 1, 0
        %v347 = vsel %vm331, 1, 0
        %v348 = vsel %vm332, 1, 0
        %v349 = vsel %vm333, 1, 0
        %v350 = vsel %vm334, 1, 0
        %v351 = vsel %vm335, 1, 0
        %v352 = vsel %vm336, 1, 0
        %v353 = vsel %vm337, 1, 0
        %v354 = vsel %vm338, 1, 0
        %v355 = vsel %vm339, 1, 0
        %v356 = vsel %vm340, 1, 0
        %v357 = vsel %vm341, 1, 0
        %v358 = vsel %vm342, 1, 0
        %v359 = vcvt.s32.f32 %v343
        %v360 = vcvt.s32.f32 %v344
        %v361 = vcvt.s32.f32 %v345
        %v362 = vcvt.s32.f32 %v346
        %v363 = vcvt.s32.f32 %v347
        %v364 = vcvt.s32.f32 %v348
        %v365 = vcvt.s32.f32 %v349
        %v366 = vcvt.s32.f32 %v350
        %v367 = vcvt.s32.f32 %v351
        %v368 = vcvt.s32.f32 %v352
        %v369 = vcvt.s32.f32 %v353
        %v370 = vcvt.s32.f32 %v354
        %v371 = vcvt.s32.f32 %v355
        %v372 = vcvt.s32.f32 %v356
        %v373 = vcvt.s32.f32 %v357
        %v374 = vcvt.s32.f32 %v358
        %v375 = vlaneseq
        %v376 = vshrl.u32 %v375, 7
        %v377 = vsub.s32 2, %v376
        %v378 = vrot.slane %v253, %v377
        %vm379 = vcmp.eq.s32.totalorder %v255, %v378
        %vm380 = vcmp.eq.s32.totalorder %v256, %v378
        %vm381 = vcmp.eq.s32.totalorder %v257, %v378
        %vm382 = vcmp.eq.s32.totalorder %v258, %v378
        %vm383 = vcmp.eq.s32.totalorder %v259, %v378
        %vm384 = vcmp.eq.s32.totalorder %v260, %v378
        %vm385 = vcmp.eq.s32.totalorder %v261, %v378
        %vm386 = vcmp.eq.s32.totalorder %v262, %v378
        %vm387 = vcmp.eq.s32.totalorder %v263, %v378
        %vm388 = vcmp.eq.s32.totalorder %v264, %v378
        %vm389 = vcmp.eq.s32.totalorder %v265, %v378
        %vm390 = vcmp.eq.s32.totalorder %v266, %v378
        %vm391 = vcmp.eq.s32.totalorder %v267, %v378
        %vm392 = vcmp.eq.s32.totalorder %v268, %v378
        %vm393 = vcmp.eq.s32.totalorder %v269, %v378
        %vm394 = vcmp.eq.s32.totalorder %v270, %v378
        %v395 = vsel %vm379, 1, 0
        %v396 = vsel %vm380, 1, 0
        %v397 = vsel %vm381, 1, 0
        %v398 = vsel %vm382, 1, 0
        %v399 = vsel %vm383, 1, 0
        %v400 = vsel %vm384, 1, 0
        %v401 = vsel %vm385, 1, 0
        %v402 = vsel %vm386, 1, 0
        %v403 = vsel %vm387, 1, 0
        %v404 = vsel %vm388, 1, 0
        %v405 = vsel %vm389, 1, 0
        %v406 = vsel %vm390, 1, 0
        %v407 = vsel %vm391, 1, 0
        %v408 = vsel %vm392, 1, 0
        %v409 = vsel %vm393, 1, 0
        %v410 = vsel %vm394, 1, 0
        %v411 = vcvt.s32.f32 %v395
        %v412 = vcvt.s32.f32 %v396
        %v413 = vcvt.s32.f32 %v397
        %v414 = vcvt.s32.f32 %v398
        %v415 = vcvt.s32.f32 %v399
        %v416 = vcvt.s32.f32 %v400
        %v417 = vcvt.s32.f32 %v401
        %v418 = vcvt.s32.f32 %v402
        %v419 = vcvt.s32.f32 %v403
        %v420 = vcvt.s32.f32 %v404
        %v421 = vcvt.s32.f32 %v405
        %v422 = vcvt.s32.f32 %v406
        %v423 = vcvt.s32.f32 %v407
        %v424 = vcvt.s32.f32 %v408
        %v425 = vcvt.s32.f32 %v409
        %v426 = vcvt.s32.f32 %v410
        %v427 = vlaneseq
        %v428 = vshrl.u32 %v427, 7
        %v429 = vsub.s32 3, %v428
        %v430 = vrot.slane %v253, %v429
        %vm431 = vcmp.eq.s32.totalorder %v255, %v430
        %vm432 = vcmp.eq.s32.totalorder %v256, %v430
        %vm433 = vcmp.eq.s32.totalorder %v257, %v430
        %vm434 = vcmp.eq.s32.totalorder %v258, %v430
        %vm435 = vcmp.eq.s32.totalorder %v259, %v430
        %vm436 = vcmp.eq.s32.totalorder %v260, %v430
        %vm437 = vcmp.eq.s32.totalorder %v261, %v430
        %vm438 = vcmp.eq.s32.totalorder %v262, %v430
        %vm439 = vcmp.eq.s32.totalorder %v263, %v430
        %vm440 = vcmp.eq.s32.totalorder %v264, %v430
        %vm441 = vcmp.eq.s32.totalorder %v265, %v430
        %vm442 = vcmp.eq.s32.totalorder %v266, %v430
        %vm443 = vcmp.eq.s32.totalorder %v267, %v430
        %vm444 = vcmp.eq.s32.totalorder %v268, %v430
        %vm445 = vcmp.eq.s32.totalorder %v269, %v430
        %vm446 = vcmp.eq.s32.totalorder %v270, %v430
        %v447 = vsel %vm431, 1, 0
        %v448 = vsel %vm432, 1, 0
        %v449 = vsel %vm433, 1, 0
        %v450 = vsel %vm434, 1, 0
        %v451 = vsel %vm435, 1, 0
        %v452 = vsel %vm436, 1, 0
        %v453 = vsel %vm437, 1, 0
        %v454 = vsel %vm438, 1, 0
        %v455 = vsel %vm439, 1, 0
        %v456 = vsel %vm440, 1, 0
        %v457 = vsel %vm441, 1, 0
        %v458 = vsel %vm442, 1, 0
        %v459 = vsel %vm443, 1, 0
        %v460 = vsel %vm444, 1, 0
        %v461 = vsel %vm445, 1, 0
        %v462 = vsel %vm446, 1, 0
        %v463 = vcvt.s32.f32 %v447
        %v464 = vcvt.s32.f32 %v448
        %v465 = vcvt.s32.f32 %v449
        %v466 = vcvt.s32.f32 %v450
        %v467 = vcvt.s32.f32 %v451
        %v468 = vcvt.s32.f32 %v452
        %v469 = vcvt.s32.f32 %v453
        %v470 = vcvt.s32.f32 %v454
        %v471 = vcvt.s32.f32 %v455
        %v472 = vcvt.s32.f32 %v456
        %v473 = vcvt.s32.f32 %v457
        %v474 = vcvt.s32.f32 %v458
        %v475 = vcvt.s32.f32 %v459
        %v476 = vcvt.s32.f32 %v460
        %v477 = vcvt.s32.f32 %v461
        %v478 = vcvt.s32.f32 %v462
        %v479 = vlaneseq
        %v480 = vshrl.u32 %v479, 7
        %v481 = vsub.s32 4, %v480
        %v482 = vrot.slane %v253, %v481
        %vm483 = vcmp.eq.s32.totalorder %v255, %v482
        %vm484 = vcmp.eq.s32.totalorder %v256, %v482
        %vm485 = vcmp.eq.s32.totalorder %v257, %v482
        %vm486 = vcmp.eq.s32.totalorder %v258, %v482
        %vm487 = vcmp.eq.s32.totalorder %v259, %v482
        %vm488 = vcmp.eq.s32.totalorder %v260, %v482
        %vm489 = vcmp.eq.s32.totalorder %v261, %v482
        %vm490 = vcmp.eq.s32.totalorder %v262, %v482
        %vm491 = vcmp.eq.s32.totalorder %v263, %v482
        %vm492 = vcmp.eq.s32.totalorder %v264, %v482
        %vm493 = vcmp.eq.s32.totalorder %v265, %v482
        %vm494 = vcmp.eq.s32.totalorder %v266, %v482
        %vm495 = vcmp.eq.s32.totalorder %v267, %v482
        %vm496 = vcmp.eq.s32.totalorder %v268, %v482
        %vm497 = vcmp.eq.s32.totalorder %v269, %v482
        %vm498 = vcmp.eq.s32.totalorder %v270, %v482
        %v499 = vsel %vm483, 1, 0
        %v500 = vsel %vm484, 1, 0
        %v501 = vsel %vm485, 1, 0
        %v502 = vsel %vm486, 1, 0
        %v503 = vsel %vm487, 1, 0
        %v504 = vsel %vm488, 1, 0
        %v505 = vsel %vm489, 1, 0
        %v506 = vsel %vm490, 1, 0
        %v507 = vsel %vm491, 1, 0
        %v508 = vsel %vm492, 1, 0
        %v509 = vsel %vm493, 1, 0
        %v510 = vsel %vm494, 1, 0
        %v511 = vsel %vm495, 1, 0
        %v512 = vsel %vm496, 1, 0
        %v513 = vsel %vm497, 1, 0
        %v514 = vsel %vm498, 1, 0
        %v515 = vcvt.s32.f32 %v499
        %v516 = vcvt.s32.f32 %v500
        %v517 = vcvt.s32.f32 %v501
        %v518 = vcvt.s32.f32 %v502
        %v519 = vcvt.s32.f32 %v503
        %v520 = vcvt.s32.f32 %v504
        %v521 = vcvt.s32.f32 %v505
        %v522 = vcvt.s32.f32 %v506
        %v523 = vcvt.s32.f32 %v507
        %v524 = vcvt.s32.f32 %v508
        %v525 = vcvt.s32.f32 %v509
        %v526 = vcvt.s32.f32 %v510
        %v527 = vcvt.s32.f32 %v511
        %v528 = vcvt.s32.f32 %v512
        %v529 = vcvt.s32.f32 %v513
        %v530 = vcvt.s32.f32 %v514
        %531 = vmatprep.subr.mxu0 %v374
        %532 = vmatpush1.msra.mxu0 %v322
        %533 = vmatprep.subr.mxu0 %v373
        %534 = vmatpush1.msra.mxu0 %v321
        %535 = vmatprep.subr.mxu0 %v372
        %536 = vmatpush1.msra.mxu0 %v320
        %537 = vmatprep.subr.mxu0 %v371
        %538 = vmatpush1.msra.mxu0 %v319
        %539 = vmatprep.subr.mxu0 %v370
        %540 = vmatpush1.msra.mxu0 %v318
        %541 = vmatprep.subr.mxu0 %v369
        %542 = vmatpush1.msra.mxu0 %v317
        %543 = vmatprep.subr.mxu0 %v368
        %544 = vmatpush1.msra.mxu0 %v316
        %545 = vmatprep.subr.mxu0 %v367
        %546 = vmatpush1.msra.mxu0 %v315
        %547 = vmatprep.subr.mxu0 %v366
        %548 = vmatpush1.msra.mxu0 %v314
        %549 = vmatprep.subr.mxu0 %v365
        %550 = vmatpush1.msra.mxu0 %v313
        %551 = vmatprep.subr.mxu0 %v364
        %552 = vmatpush1.msra.mxu0 %v312
        %553 = vmatprep.subr.mxu0 %v363
        %554 = vmatpush1.msra.mxu0 %v311
        %555 = vmatprep.subr.mxu0 %v362
        %556 = vmatpush1.msra.mxu0 %v310
        %557 = vmatprep.subr.mxu0 %v361
        %558 = vmatpush1.msra.mxu0 %v309
        %559 = vmatprep.subr.mxu0 %v360
        %560 = vmatpush1.msra.mxu0 %v308
        %561 = vmatprep.subr.mxu0 %v359
        %562 = vmatpush1.msra.mxu0 %v307
        %563 = vmatprep.subr.mxu0 0.0
        %564 = vmatpush2.msra.mxu0 0.0
        %565 = vmatprep.subr.mxu0 0.0
        %566 = vmatpush2.msra.mxu0 0.0
        %567 = vmatprep.subr.mxu0 0.0
        %568 = vmatpush2.msra.mxu0 0.0
        %569 = vmatprep.subr.mxu0 0.0
        %570 = vmatpush2.msra.mxu0 0.0
        %571 = vmatprep.subr.mxu0 0.0
        %572 = vmatpush2.msra.mxu0 0.0
        %573 = vmatprep.subr.mxu0 0.0
        %574 = vmatpush2.msra.mxu0 0.0
        %575 = vmatprep.subr.mxu0 0.0
        %576 = vmatpush2.msra.mxu0 0.0
        %577 = vmatprep.subr.mxu0 0.0
        %578 = vmatpush2.msra.mxu0 0.0
        %579 = vmatprep.subr.mxu0 0.0
        %580 = vmatpush2.msra.mxu0 0.0
        %581 = vmatprep.subr.mxu0 0.0
        %582 = vmatpush2.msra.mxu0 0.0
        %583 = vmatprep.subr.mxu0 0.0
        %584 = vmatpush2.msra.mxu0 0.0
        %585 = vmatprep.subr.mxu0 0.0
        %586 = vmatpush2.msra.mxu0 0.0
        %587 = vmatprep.subr.mxu0 0.0
        %588 = vmatpush2.msra.mxu0 0.0
        %589 = vmatprep.subr.mxu0 0.0
        %590 = vmatpush2.msra.mxu0 0.0
        %591 = vmatprep.subr.mxu0 0.0
        %592 = vmatpush2.msra.mxu0 0.0
        %593 = vmatprep.subr.mxu0 0.0
        %594 = vmatpush2.msra.mxu0 0.0
        %595 = vmatprep.mubr.f32.mxu0 0.0
        %596 = vmatmul.mubr.f32.gmra.mxu0 %v251
        %v597 = vpop.f32.mrf.mxu0
        %v598 = vadd.f32 0.0, %v597
        %v599 = vpop.f32.mrf.mxu0
        %v600 = vadd.f32 0.0, %v599
        %601 = vmatprep.mubr.f32.mxu0 0.0
        %602 = vmatmul.mubr.f32.gmra.mxu0 %v252
        %v603 = vpop.f32.mrf.mxu0
        %v604 = vadd.f32 0.0, %v603
        %v605 = vpop.f32.mrf.mxu0
        %v606 = vadd.f32 0.0, %v605
        %607 = vdwg.mxu0
        %608 = vmatprep.subr.mxu0 %v478
        %609 = vmatpush1.msra.mxu0 %v426
        %610 = vmatprep.subr.mxu0 %v477
        %611 = vmatpush1.msra.mxu0 %v425
        %612 = vmatprep.subr.mxu0 %v476
        %613 = vmatpush1.msra.mxu0 %v424
        %614 = vmatprep.subr.mxu0 %v475
        %615 = vmatpush1.msra.mxu0 %v423
        %616 = vmatprep.subr.mxu0 %v474
        %617 = vmatpush1.msra.mxu0 %v422
        %618 = vmatprep.subr.mxu0 %v473
        %619 = vmatpush1.msra.mxu0 %v421
        %620 = vmatprep.subr.mxu0 %v472
        %621 = vmatpush1.msra.mxu0 %v420
        %622 = vmatprep.subr.mxu0 %v471
        %623 = vmatpush1.msra.mxu0 %v419
        %624 = vmatprep.subr.mxu0 %v470
        %625 = vmatpush1.msra.mxu0 %v418
        %626 = vmatprep.subr.mxu0 %v469
        %627 = vmatpush1.msra.mxu0 %v417
        %628 = vmatprep.subr.mxu0 %v468
        %629 = vmatpush1.msra.mxu0 %v416
        %630 = vmatprep.subr.mxu0 %v467
        %631 = vmatpush1.msra.mxu0 %v415
        %632 = vmatprep.subr.mxu0 %v466
        %633 = vmatpush1.msra.mxu0 %v414
        %634 = vmatprep.subr.mxu0 %v465
        %635 = vmatpush1.msra.mxu0 %v413
        %636 = vmatprep.subr.mxu0 %v464
        %637 = vmatpush1.msra.mxu0 %v412
        %638 = vmatprep.subr.mxu0 %v463
        %639 = vmatpush1.msra.mxu0 %v411
        %640 = vmatprep.subr.mxu0 0.0
        %641 = vmatpush2.msra.mxu0 0.0
        %642 = vmatprep.subr.mxu0 0.0
        %643 = vmatpush2.msra.mxu0 0.0
        %644 = vmatprep.subr.mxu0 0.0
        %645 = vmatpush2.msra.mxu0 0.0
        %646 = vmatprep.subr.mxu0 0.0
        %647 = vmatpush2.msra.mxu0 0.0
        %648 = vmatprep.subr.mxu0 0.0
        %649 = vmatpush2.msra.mxu0 0.0
        %650 = vmatprep.subr.mxu0 0.0
        %651 = vmatpush2.msra.mxu0 0.0
        %652 = vmatprep.subr.mxu0 0.0
        %653 = vmatpush2.msra.mxu0 0.0
        %654 = vmatprep.subr.mxu0 0.0
        %655 = vmatpush2.msra.mxu0 0.0
        %656 = vmatprep.subr.mxu0 0.0
        %657 = vmatpush2.msra.mxu0 0.0
        %658 = vmatprep.subr.mxu0 0.0
        %659 = vmatpush2.msra.mxu0 0.0
        %660 = vmatprep.subr.mxu0 0.0
        %661 = vmatpush2.msra.mxu0 0.0
        %662 = vmatprep.subr.mxu0 0.0
        %663 = vmatpush2.msra.mxu0 0.0
        %664 = vmatprep.subr.mxu0 0.0
        %665 = vmatpush2.msra.mxu0 0.0
        %666 = vmatprep.subr.mxu0 0.0
        %667 = vmatpush2.msra.mxu0 0.0
        %668 = vmatprep.subr.mxu0 0.0
        %669 = vmatpush2.msra.mxu0 0.0
        %670 = vmatprep.subr.mxu0 0.0
        %671 = vmatpush2.msra.mxu0 0.0
        %672 = vmatprep.mubr.f32.mxu0 0.0
        %673 = vmatmul.mubr.f32.gmra.mxu0 %v251
        %v674 = vpop.f32.mrf.mxu0
        %v675 = vadd.f32 0.0, %v674
        %v676 = vpop.f32.mrf.mxu0
        %v677 = vadd.f32 0.0, %v676
        %678 = vmatprep.mubr.f32.mxu0 0.0
        %679 = vmatmul.mubr.f32.gmra.mxu0 %v252
        %v680 = vpop.f32.mrf.mxu0
        %v681 = vadd.f32 0.0, %v680
        %v682 = vpop.f32.mrf.mxu0
        %v683 = vadd.f32 0.0, %v682
        %684 = vdwg.mxu0
        %685 = vmatprep.subr.mxu0 0.0
        %686 = vmatpush1.msra.mxu0 %v530
        %687 = vmatprep.subr.mxu0 0.0
        %688 = vmatpush1.msra.mxu0 %v529
        %689 = vmatprep.subr.mxu0 0.0
        %690 = vmatpush1.msra.mxu0 %v528
        %691 = vmatprep.subr.mxu0 0.0
        %692 = vmatpush1.msra.mxu0 %v527
        %693 = vmatprep.subr.mxu0 0.0
        %694 = vmatpush1.msra.mxu0 %v526
        %695 = vmatprep.subr.mxu0 0.0
        %696 = vmatpush1.msra.mxu0 %v525
        %697 = vmatprep.subr.mxu0 0.0
        %698 = vmatpush1.msra.mxu0 %v524
        %699 = vmatprep.subr.mxu0 0.0
        %700 = vmatpush1.msra.mxu0 %v523
        %701 = vmatprep.subr.mxu0 0.0
        %702 = vmatpush1.msra.mxu0 %v522
        %703 = vmatprep.subr.mxu0 0.0
        %704 = vmatpush1.msra.mxu0 %v521
        %705 = vmatprep.subr.mxu0 0.0
        %706 = vmatpush1.msra.mxu0 %v520
        %707 = vmatprep.subr.mxu0 0.0
        %708 = vmatpush1.msra.mxu0 %v519
        %709 = vmatprep.subr.mxu0 0.0
        %710 = vmatpush1.msra.mxu0 %v518
        %711 = vmatprep.subr.mxu0 0.0
        %712 = vmatpush1.msra.mxu0 %v517
        %713 = vmatprep.subr.mxu0 0.0
        %714 = vmatpush1.msra.mxu0 %v516
        %715 = vmatprep.subr.mxu0 0.0
        %716 = vmatpush1.msra.mxu0 %v515
        %717 = vmatprep.subr.mxu0 0.0
        %718 = vmatpush2.msra.mxu0 0.0
        %719 = vmatprep.subr.mxu0 0.0
        %720 = vmatpush2.msra.mxu0 0.0
        %721 = vmatprep.subr.mxu0 0.0
        %722 = vmatpush2.msra.mxu0 0.0
        %723 = vmatprep.subr.mxu0 0.0
        %724 = vmatpush2.msra.mxu0 0.0
        %725 = vmatprep.subr.mxu0 0.0
        %726 = vmatpush2.msra.mxu0 0.0
        %727 = vmatprep.subr.mxu0 0.0
        %728 = vmatpush2.msra.mxu0 0.0
        %729 = vmatprep.subr.mxu0 0.0
        %730 = vmatpush2.msra.mxu0 0.0
        %731 = vmatprep.subr.mxu0 0.0
        %732 = vmatpush2.msra.mxu0 0.0
        %733 = vmatprep.subr.mxu0 0.0
        %734 = vmatpush2.msra.mxu0 0.0
        %735 = vmatprep.subr.mxu0 0.0
        %736 = vmatpush2.msra.mxu0 0.0
        %737 = vmatprep.subr.mxu0 0.0
        %738 = vmatpush2.msra.mxu0 0.0
        %739 = vmatprep.subr.mxu0 0.0
        %740 = vmatpush2.msra.mxu0 0.0
        %741 = vmatprep.subr.mxu0 0.0
        %742 = vmatpush2.msra.mxu0 0.0
        %743 = vmatprep.subr.mxu0 0.0
        %744 = vmatpush2.msra.mxu0 0.0
        %745 = vmatprep.subr.mxu0 0.0
        %746 = vmatpush2.msra.mxu0 0.0
        %747 = vmatprep.subr.mxu0 0.0
        %748 = vmatpush2.msra.mxu0 0.0
        %749 = vmatprep.mubr.f32.mxu0 0.0
        %750 = vmatmul.mubr.f32.gmra.mxu0 %v251
        %v751 = vpop.f32.mrf.mxu0
        %v752 = vadd.f32 0.0, %v751
        %v753 = vpop.f32.mrf.mxu0
        %754 = vmatprep.mubr.f32.mxu0 0.0
        %755 = vmatmul.mubr.f32.gmra.mxu0 %v252
        %v756 = vpop.f32.mrf.mxu0
        %v757 = vadd.f32 0.0, %v756
        %v758 = vpop.f32.mrf.mxu0
        %759 = vdwg.mxu0
        %vm760 = vcmp.lt.s32.totalorder %v255, 10
        %vm761 = vcmp.lt.s32.totalorder %v256, 10
        %v762 = vadd.f32 %v600, %v677
        %v763 = vadd.f32 %v606, %v683
        %v764 = vsel %vm760, %v762, %v600
        %v765 = vsel %vm761, %v763, %v606
        %v766 = vadd.f32 %v675, %v752
        %v767 = vadd.f32 %v681, %v757
        %v768 = vsel %vm760, %v766, %v675
        %v769 = vsel %vm761, %v767, %v681
        %v770 = vsub.f32 %v600, %v677
        %v771 = vsub.f32 %v606, %v683
        %v772 = vand.u32 2147483647, %v770
        %v773 = vand.u32 2147483647, %v771
        %v774 = vsel %vm760, %v772, %v677
        %v775 = vsel %vm761, %v773, %v683
        %v776 = vsub.f32 %v675, %v752
        %v777 = vsub.f32 %v681, %v757
        %v778 = vand.u32 2147483647, %v776
        %v779 = vand.u32 2147483647, %v777
        %v780 = vsel %vm760, %v778, %v752
        %v781 = vsel %vm761, %v779, %v757
        %v782 = vld [vmem:[#allocation2] sm:$0xff]
        %v783 = vld [vmem:[%s3] sm:$0xff]
        %785 = vset.pattern.permute.xlu0 0
        %786 = vperm.xlu0 %785, %v783
        %v787 = vpop.permute.xlu0 %786
        %vm789 = vcmask 654336
        %v791 = vsel %vm789, %v782, 0
        %793 = vmatprep.subr.mxu0 0.0
        %794 = vmatpush1.msra.mxu0 0.0
        %795 = vmatprep.subr.mxu0 0.0
        %796 = vmatpush1.msra.mxu0 0.0
        %797 = vmatprep.subr.mxu0 0.0
        %798 = vmatpush1.msra.mxu0 0.0
        %799 = vmatprep.subr.mxu0 0.0
        %800 = vmatpush1.msra.mxu0 0.0
        %801 = vmatprep.subr.mxu0 0.0
        %802 = vmatpush1.msra.mxu0 0.0
        %803 = vmatprep.subr.mxu0 0.0
        %804 = vmatpush1.msra.mxu0 0.0
        %805 = vmatprep.subr.mxu0 0.0
        %806 = vmatpush1.msra.mxu0 %v781
        %807 = vmatprep.subr.mxu0 0.0
        %808 = vmatpush1.msra.mxu0 %v780
        %809 = vmatprep.subr.mxu0 0.0
        %810 = vmatpush1.msra.mxu0 %v775
        %811 = vmatprep.subr.mxu0 0.0
        %812 = vmatpush1.msra.mxu0 %v774
        %813 = vmatprep.subr.mxu0 0.0
        %814 = vmatpush1.msra.mxu0 %v769
        %815 = vmatprep.subr.mxu0 0.0
        %816 = vmatpush1.msra.mxu0 %v768
        %817 = vmatprep.subr.mxu0 0.0
        %818 = vmatpush1.msra.mxu0 %v765
        %819 = vmatprep.subr.mxu0 0.0
        %820 = vmatpush1.msra.mxu0 %v764
        %821 = vmatprep.subr.mxu0 0.0
        %822 = vmatpush1.msra.mxu0 %v604
        %823 = vmatprep.subr.mxu0 0.0
        %824 = vmatpush1.msra.mxu0 %v598
        %825 = vmatprep.subr.mxu0 0.0
        %826 = vmatpush2.msra.mxu0 0.0
        %827 = vmatprep.subr.mxu0 0.0
        %828 = vmatpush2.msra.mxu0 0.0
        %829 = vmatprep.subr.mxu0 0.0
        %830 = vmatpush2.msra.mxu0 0.0
        %831 = vmatprep.subr.mxu0 0.0
        %832 = vmatpush2.msra.mxu0 0.0
        %833 = vmatprep.subr.mxu0 0.0
        %834 = vmatpush2.msra.mxu0 0.0
        %835 = vmatprep.subr.mxu0 0.0
        %836 = vmatpush2.msra.mxu0 0.0
        %837 = vmatprep.subr.mxu0 0.0
        %838 = vmatpush2.msra.mxu0 0.0
        %839 = vmatprep.subr.mxu0 0.0
        %840 = vmatpush2.msra.mxu0 0.0
        %841 = vmatprep.subr.mxu0 0.0
        %842 = vmatpush2.msra.mxu0 0.0
        %843 = vmatprep.subr.mxu0 0.0
        %844 = vmatpush2.msra.mxu0 0.0
        %845 = vmatprep.subr.mxu0 0.0
        %846 = vmatpush2.msra.mxu0 0.0
        %847 = vmatprep.subr.mxu0 0.0
        %848 = vmatpush2.msra.mxu0 0.0
        %849 = vmatprep.subr.mxu0 0.0
        %850 = vmatpush2.msra.mxu0 0.0
        %851 = vmatprep.subr.mxu0 0.0
        %852 = vmatpush2.msra.mxu0 0.0
        %853 = vmatprep.subr.mxu0 0.0
        %854 = vmatpush2.msra.mxu0 0.0
        %855 = vmatprep.subr.mxu0 0.0
        %856 = vmatpush2.msra.mxu0 0.0
        %857 = vmatprep.mubr.f32.mxu0 0.0
        %858 = vmatmul.mubr.f32.gmra.mxu0 %v791
        %v859 = vpop.f32.mrf.mxu0
        %v860 = vadd.f32 %v787, %v859
        %v861 = vpop.f32.mrf.mxu0
        %862 = vdwg.mxu0
        %863 = vst [vmem:[%s238] sm:$0xff] %v860
        %s864 = sand.u32 %s137, 1
        %s865 = scalar_lea.sflag [#allocation4], %s864
        %s866 = sand.u32 %s137, 1
        %s867 = smul.addr %s866, 8
        %s868 = scalar_lea.vmem [#allocation5], %s867
        // Predicated region
        $region41: #{tpu_custom_call.1} parent=35 // pred_check
          %p869 = pneg %p147
        $region42: #{tpu_custom_call.1} parent=35 // pred_check_branch
          %871 = sbr.rel (%p869) target = $region44
        $region43: #{tpu_custom_call.1} parent=35 // pred_region
          %s873 = ssub.s32 128, 128
          %874 = vsyncadd %s865, %s873
          %s875 = sadd.s32 %s24, %s23
          %s876 = smul.addr %s875, 128
          %s877 = scalar_lea.hbm %s4, %s876
          %s879 = sshll.u32 %s868, 4
          %s880 = int_to_ptr.vmem [resolvable:$true] %s879
          %882 = dma.vmem_to_hbm [thread:$0]  %s880, 128, %s877, %s865
        $region44: #{tpu_custom_call.1} parent=35 // pred_fallthru
          _
      $region36: #{tpu_custom_call.1} parent=5 // pred_fallthru
        _
      %p883 = scmp.le.s32.totalorder 2, %s14
      // Predicated region
      $region45: #{tpu_custom_call.1} parent=5 // pred_check
        %p884 = pneg %p883
      $region46: #{tpu_custom_call.1} parent=5 // pred_check_branch
        %886 = sbr.rel (%p884) target = $region48
      $region47: #{tpu_custom_call.1} parent=5 // pred_region
        %s887 = ssub.s32 %s14, 2
        // Predicated region
        $region49: #{tpu_custom_call.1} parent=47 // pred_check
          %p888 = pneg %p153
        $region50: #{tpu_custom_call.1} parent=47 // pred_check_branch
          %890 = sbr.rel (%p888) target = $region52
        $region51: #{tpu_custom_call.1} parent=47 // pred_region
          %s891 = sand.u32 %s138, 1
          %s892 = scalar_lea.sflag [#allocation4], %s891
          %s893 = sand.u32 %s138, 1
          %s894 = smul.addr %s893, 8
          %s895 = scalar_lea.vmem [#allocation5], %s894
          %896 = dma.done %s892, 128
        $region52: #{tpu_custom_call.1} parent=47 // pred_fallthru
          _
      $region48: #{tpu_custom_call.1} parent=5 // pred_fallthru
        _
    $region6: #{tpu_custom_call.1} parent=1 // loop_footer
      %s18 = sadd.s32 1, %s14
    $region7: #{tpu_custom_call.1} parent=1 // loop_footer_branch
      %13 = sbr.rel target = $region3
    $region8: #{tpu_custom_call.1} parent=1 // loop_exit
      _
    %897 = vsyncpa [#allocation3], 1
    %s898 = scalar_lea.sflag [#allocation3], 1
    %899 = vsyncpa %s898, 1
    %900 = vsyncpa [#allocation4], 1
    %s901 = scalar_lea.sflag [#allocation4], 1
    %902 = vsyncpa %s901, 1

</llo_original>
